<compile_context>
chip_gen: v7x
topology: tpu7x:2x2x1
jax: 0.10.0
libtpu: 0.0.40
codegen_flags: <defaults>
</compile_context>

<pallas_src>
import jax
import jax.numpy as jnp
from jax.experimental import pallas as pl
from jax.experimental.pallas import tpu as pltpu

_NEG = -1e30  # padded vocab columns: never wins the max, exp() underflows to 0


def _round_up(x, m):
    return (x + m - 1) // m * m


# -----------------------------------------------------------------------------
# Kernel A (one-time): fused bigram table  T = emb @ W^T + b   (V_PAD, V_PAD)
# -----------------------------------------------------------------------------
def fused_table_kernel(emb_ref, w_ref, b_ref, table_ref):
    # Contract on the embedding axis via dimension_numbers (no host-side W.T).
    table_ref[...] = jax.lax.dot_general(
        emb_ref[...], w_ref[...],
        dimension_numbers=(((1,), (1,)), ((), ())),
        preferred_element_type=jnp.float32,
    ) + b_ref[...]


def make_fused_table(emb_table, w, b):
    vocab, n_embd = emb_table.shape
    v_pad = _round_up(vocab, 128)
    k_pad = _round_up(n_embd, 128)

    emb_p = jnp.zeros((v_pad, k_pad), jnp.float32).at[:vocab, :n_embd].set(
        jnp.asarray(emb_table, jnp.float32))
    w_p = jnp.zeros((v_pad, k_pad), jnp.float32).at[:vocab, :n_embd].set(
        jnp.asarray(w, jnp.float32))
    b_p = jnp.full((1, v_pad), _NEG, jnp.float32).at[0, :vocab].set(
        jnp.asarray(b, jnp.float32))

    return pl.pallas_call(
        fused_table_kernel,
        out_shape=jax.ShapeDtypeStruct((v_pad, v_pad), jnp.float32),
        in_specs=[
            pl.BlockSpec(memory_space=pltpu.MemorySpace.VMEM),
            pl.BlockSpec(memory_space=pltpu.MemorySpace.VMEM),
            pl.BlockSpec(memory_space=pltpu.MemorySpace.VMEM),
        ],
        out_specs=pl.BlockSpec(memory_space=pltpu.MemorySpace.VMEM),
    )(emb_p, w_p, b_p)


# -----------------------------------------------------------------------------
# In-kernel helpers: one-hot MXU row gather + vectorized per-row cross-entropy
# -----------------------------------------------------------------------------
def _gather_logits(idx_col, table):
    # idx_col: (CHUNK, 1) int32, table: (V_PAD, V_PAD) f32 -> (CHUNK, V_PAD) f32
    chunk = idx_col.shape[0]
    v_pad = table.shape[1]
    col = jax.lax.broadcasted_iota(jnp.int32, (chunk, v_pad), 1)
    one_hot = (col == idx_col).astype(jnp.float32)
    return jnp.dot(one_hot, table, preferred_element_type=jnp.float32)


def _row_ce(logits, tgt_col):
    # logits: (CHUNK, V_PAD) f32, tgt_col: (CHUNK, 1) int32 -> (CHUNK, 1) f32
    m = jnp.max(logits, axis=-1, keepdims=True)
    lse = m + jnp.log(jnp.sum(jnp.exp(logits - m), axis=-1, keepdims=True))
    col = jax.lax.broadcasted_iota(jnp.int32, logits.shape, 1)
    tgt_logit = jnp.sum(jnp.where(col == tgt_col, logits, 0.0),
                        axis=-1, keepdims=True)
    return lse - tgt_logit


# -----------------------------------------------------------------------------
# Hot-path kernels (CHUNK tokens per grid step)
# -----------------------------------------------------------------------------
def logits_ce_kernel(idx_ref, tgt_ref, table_ref, logits_ref, ce_ref):
    logits = _gather_logits(idx_ref[...], table_ref[...])
    logits_ref[...] = logits
    ce_ref[...] = _row_ce(logits, tgt_ref[...])


def ce_only_kernel(idx_ref, tgt_ref, table_ref, ce_ref):
    logits = _gather_logits(idx_ref[...], table_ref[...])
    ce_ref[...] = _row_ce(logits, tgt_ref[...])


def logits_only_kernel(idx_ref, table_ref, logits_ref):
    logits_ref[...] = _gather_logits(idx_ref[...], table_ref[...])


# -----------------------------------------------------------------------------
# Wrapper: matches BigramLanguageModel.forward semantics
# -----------------------------------------------------------------------------
def bigram_forward(idx, emb_table, w, b, targets=None, return_logits=True):
    """idx: (B, T) int tokens. emb_table: (vocab, n_embd). w: (vocab, n_embd)
    (PyTorch nn.Linear layout). b: (vocab,).
    targets given  -> ((B*T, vocab) logits, scalar mean CE loss)
                      (logits is None if return_logits=False).
    targets=None   -> ((B, T, vocab) logits, None)."""
    B, T = idx.shape
    vocab, _ = emb_table.shape
    BT = B * T
    v_pad = _round_up(vocab, 128)

    # One-time fused table (in a generate() loop this would be hoisted/cached).
    table = make_fused_table(emb_table, w, b)           # (V_PAD, V_PAD) f32

    chunk = min(256, _round_up(BT, 8))                  # sublane-dense chunk
    num_chunks = (BT + chunk - 1) // chunk
    bt_pad = num_chunks * chunk

    idx_flat = jnp.zeros((bt_pad, 1), jnp.int32).at[:BT, 0].set(
        idx.reshape(BT).astype(jnp.int32))

    tok_spec = pl.BlockSpec((chunk, 1), lambda c: (c, 0))
    table_spec = pl.BlockSpec((v_pad, v_pad), lambda c: (0, 0))   # VMEM-resident
    logits_spec = pl.BlockSpec((chunk, v_pad), lambda c: (c, 0))
    ce_spec = pl.BlockSpec((chunk, 1), lambda c: (c, 0))
    cparams = pltpu.CompilerParams(dimension_semantics=("parallel",))

    if targets is None:
        logits_pad = pl.pallas_call(
            logits_only_kernel,
            out_shape=jax.ShapeDtypeStruct((bt_pad, v_pad), jnp.float32),
            grid_spec=pltpu.PrefetchScalarGridSpec(
                num_scalar_prefetch=0,
                grid=(num_chunks,),
                in_specs=[tok_spec, table_spec],
                out_specs=logits_spec),
            compiler_params=cparams,
        )(idx_flat, table)
        # NOTE: the 128->vocab column slice is not lane-aligned and costs one
        # extra copy; kept so the API matches the PyTorch module exactly.
        logits = logits_pad[:BT, :vocab].reshape(B, T, vocab)
        return logits, None

    tgt_flat = jnp.zeros((bt_pad, 1), jnp.int32).at[:BT, 0].set(
        targets.reshape(BT).astype(jnp.int32))

    if return_logits:
        logits_pad, ce_rows = pl.pallas_call(
            logits_ce_kernel,
            out_shape=(jax.ShapeDtypeStruct((bt_pad, v_pad), jnp.float32),
                       jax.ShapeDtypeStruct((bt_pad, 1), jnp.float32)),
            grid_spec=pltpu.PrefetchScalarGridSpec(
                num_scalar_prefetch=0,
                grid=(num_chunks,),
                in_specs=[tok_spec, tok_spec, table_spec],
                out_specs=[logits_spec, ce_spec]),
            compiler_params=cparams,
        )(idx_flat, tgt_flat, table)
        loss = jnp.mean(ce_rows[:BT, 0])
        logits = logits_pad[:BT, :vocab]
        return logits, loss

    # Loss-only variant: skip the logits HBM writeback entirely.
    ce_rows = pl.pallas_call(
        ce_only_kernel,
        out_shape=jax.ShapeDtypeStruct((bt_pad, 1), jnp.float32),
        grid_spec=pltpu.PrefetchScalarGridSpec(
            num_scalar_prefetch=0,
            grid=(num_chunks,),
            in_specs=[tok_spec, tok_spec, table_spec],
            out_specs=ce_spec),
        compiler_params=cparams,
    )(idx_flat, tgt_flat, table)
    return None, jnp.mean(ce_rows[:BT, 0])


# -----------------------------------------------------------------------------
# Pure-JAX reference + test
# -----------------------------------------------------------------------------
def _reference(idx, emb_table, w, b, targets=None):
    tok_emb = jnp.asarray(emb_table)[idx]                       # (B, T, n_embd)
    logits = tok_emb @ jnp.asarray(w).T + jnp.asarray(b)        # (B, T, vocab)
    if targets is None:
        return logits, None
    B, T, C = logits.shape
    flat = logits.reshape(B * T, C)
    tgt = targets.reshape(B * T)
    lse = jax.scipy.special.logsumexp(flat, axis=-1)
    loss = jnp.mean(lse - flat[jnp.arange(B * T), tgt])
    return flat, loss


if __name__ == "__main__":
    vocab_size = 65   # char-level vocab (e.g. tiny-shakespeare)
    n_embd = 32
    B, T = 2, 8

    key = jax.random.PRNGKey(0)
    k1, k2, k3, k4, k5 = jax.random.split(key, 5)

    emb_table = jax.random.normal(k1, (vocab_size, n_embd), jnp.float32) * 0.02
    w = jax.random.normal(k2, (vocab_size, n_embd), jnp.float32) * 0.02  # nn.Linear weight
    b = jax.random.normal(k3, (vocab_size,), jnp.float32) * 0.02         # nn.Linear bias
    idx = jax.random.randint(k4, (B, T), 0, vocab_size, jnp.int32)
    targets = jax.random.randint(k5, (B, T), 0, vocab_size, jnp.int32)

    ref_logits, ref_loss = _reference(idx, emb_table, w, b, targets)

    # Training path (targets given): flat logits + mean cross-entropy loss.
    logits, loss = bigram_forward(idx, emb_table, w, b, targets)
    jax.block_until_ready((logits, loss))
    assert logits.shape == (B * T, vocab_size)
    assert jnp.allclose(logits, ref_logits, atol=1e-4, rtol=1e-4), (
        float(jnp.max(jnp.abs(logits - ref_logits))))
    assert jnp.allclose(loss, ref_loss, atol=1e-4, rtol=1e-4), (
        float(loss), float(ref_loss))

    # Loss-only variant (no logits HBM writeback).
    none_logits, loss2 = bigram_forward(idx, emb_table, w, b, targets,
                                        return_logits=False)
    jax.block_until_ready(loss2)
    assert none_logits is None
    assert jnp.allclose(loss2, ref_loss, atol=1e-4, rtol=1e-4), (
        float(loss2), float(ref_loss))

    # Generation path (targets=None): (B, T, vocab) logits, no loss, no CE work.
    gen_logits, gen_loss = bigram_forward(idx, emb_table, w, b, None)
    jax.block_until_ready(gen_logits)
    assert gen_loss is None
    assert gen_logits.shape == (B, T, vocab_size)
    assert jnp.allclose(gen_logits.reshape(B * T, vocab_size), ref_logits,
                        atol=1e-4, rtol=1e-4)

    print("KERNEL_OK")
</pallas_src>

<mosaic_0001>
module attributes {stable_mosaic.version = 11 : i64} {
  func.func @fused_table_kernel(%arg0: memref<128x128xf32, #tpu.memory_space<vmem>>, %arg1: memref<128x128xf32, #tpu.memory_space<vmem>>, %arg2: memref<1x128xf32, #tpu.memory_space<vmem>>, %arg3: memref<128x128xf32, #tpu.memory_space<vmem>>) attributes {dimension_semantics = [], scalar_prefetch = 0 : i64, scratch_operands = 0 : i64, tpu.core_type = #tpu.core_type<tc>} {
    %c0 = arith.constant 0 : index
    %c0_0 = arith.constant 0 : index
    %0 = vector.load %arg0[%c0, %c0_0] : memref<128x128xf32, #tpu.memory_space<vmem>>, vector<128x128xf32>
    %c0_1 = arith.constant 0 : index
    %c0_2 = arith.constant 0 : index
    %1 = vector.load %arg1[%c0_1, %c0_2] : memref<128x128xf32, #tpu.memory_space<vmem>>, vector<128x128xf32>
    %cst = arith.constant dense<0.000000e+00> : vector<128x128xf32>
    %2 = tpu.matmul %0, %1, %cst {dimension_numbers = #tpu.dot_dimension_numbers<[1], [1], [0], [0], [0, 0, 1, 0], [], []>} : vector<128x128xf32>, vector<128x128xf32>, vector<128x128xf32> -> vector<128x128xf32>
    %c0_3 = arith.constant 0 : index
    %c0_4 = arith.constant 0 : index
    %3 = vector.load %arg2[%c0_3, %c0_4] : memref<1x128xf32, #tpu.memory_space<vmem>>, vector<1x128xf32>
    %4 = vector.broadcast %3 : vector<1x128xf32> to vector<128x128xf32>
    %5 = arith.addf %2, %4 : vector<128x128xf32>
    %c0_5 = arith.constant 0 : index
    %c0_6 = arith.constant 0 : index
    %6 = vector.load %arg3[%c0_5, %c0_6] : memref<128x128xf32, #tpu.memory_space<vmem>>, vector<128x128xf32>
    tpu.vector_store %arg3[%c0_5, %c0_6], %5 {strides = array<i32>} : memref<128x128xf32, #tpu.memory_space<vmem>>, vector<128x128xf32>,
    return
  }
}

</mosaic_0001>

<llo_original>
// kernel: tpu_custom_call.1
$region0: #{tpu_custom_call.1}
  #allocation0 [shape = 'u32[]', space=smem, size = 0x4, offset = 0x4, fixed_abs, tag = 'smem constant byte address 0x4 - core index']
  #allocation1 [shape = 'u32[144,128]{1,0:T(1,128)}', space=vmem, size = 0x12000, scoped, tag = 'internal scratch']
  %s0 = inlined_call_operand.hbm [shape: f32[128,128], index: 0, kind: input, shape index: {}]
  %s1 = inlined_call_operand.hbm [shape: f32[128,128], index: 1, kind: input, shape index: {}]
  %s2 = inlined_call_operand.vmem [shape: f32[1,128], index: 2, kind: input, shape index: {}]
  %s3 = inlined_call_operand.hbm [shape: f32[128,128], index: 3, kind: output, shape index: {}]
  %s4 = sld [smem:[#allocation0]]
  $region30: #{tpu_custom_call.1} parent=0
    _
  %s6 = ssub.s32 1, %s4
  %s7 = scalar_select 0, %s6, %s4
  $region1: #{tpu_custom_call.1} parent=0
    #allocation2 [shape = 'u8[65536]{0}', space=vmem, size = 0x10000, scoped, tag = 'input window, operand 0, single buffered']
    #allocation3 [shape = 's32[1]{0}', space=sflag, size = 0x4, scoped, tag = 'scoped memory for tpu_custom_call.1']
    #allocation4 [shape = 's32[1]{0}', space=sflag, size = 0x4, scoped, tag = 'scoped memory for tpu_custom_call.1']
    #allocation5 [shape = 'u8[65536]{0}', space=vmem, size = 0x10000, scoped, tag = 'input window, operand 1, single buffered']
    #allocation6 [shape = 's32[1]{0}', space=sflag, size = 0x4, scoped, tag = 'scoped memory for tpu_custom_call.1']
    #allocation7 [shape = 'u8[65536]{0}', space=vmem, size = 0x10000, scoped, tag = 'output window, operand 0, single buffered']
    %8 = vsyncpa [#allocation3], 0
    %9 = vsyncpa [#allocation6], 0
    %10 = vsyncpa [#allocation4], 0
    // Predicated region
    $region2: #{tpu_custom_call.1} parent=1 // pred_check
      _
    $region3: #{tpu_custom_call.1} parent=1 // pred_check_branch
      %12 = sbr.rel (0) target = $region5
    $region4: #{tpu_custom_call.1} parent=1 // pred_region
      %s14 = ssub.s32 2048, 2048
      %15 = vsyncadd [#allocation3], %s14
      %s16 = sshll.u32 [#allocation2], 4
      %s17 = int_to_ptr.vmem [resolvable:$true] %s16
      %22 = dma.hbm_to_vmem [thread:$0]  %s0, 2048, %s17, [#allocation3], 128, 128, 8
    $region5: #{tpu_custom_call.1} parent=1 // pred_fallthru
      _
    // Predicated region
    $region6: #{tpu_custom_call.1} parent=1 // pred_check
      _
    $region7: #{tpu_custom_call.1} parent=1 // pred_check_branch
      %24 = sbr.rel (0) target = $region9
    $region8: #{tpu_custom_call.1} parent=1 // pred_region
      %s26 = ssub.s32 2048, 2048
      %27 = vsyncadd [#allocation6], %s26
      %s28 = sshll.u32 [#allocation5], 4
      %s29 = int_to_ptr.vmem [resolvable:$true] %s28
      %34 = dma.hbm_to_vmem [thread:$0]  %s1, 2048, %s29, [#allocation6], 128, 128, 8
    $region9: #{tpu_custom_call.1} parent=1 // pred_fallthru
      _
    // Predicated region
    $region10: #{tpu_custom_call.1} parent=1 // pred_check
      _
    $region11: #{tpu_custom_call.1} parent=1 // pred_check_branch
      %36 = sbr.rel (0) target = $region13
    $region12: #{tpu_custom_call.1} parent=1 // pred_region
      _
    $region13: #{tpu_custom_call.1} parent=1 // pred_fallthru
      _
    // Predicated region
    $region14: #{tpu_custom_call.1} parent=1 // pred_check
      _
    $region15: #{tpu_custom_call.1} parent=1 // pred_check_branch
      %38 = sbr.rel (0) target = $region17
    $region16: #{tpu_custom_call.1} parent=1 // pred_region
      %39 = dma.done [#allocation3], 2048
    $region17: #{tpu_custom_call.1} parent=1 // pred_fallthru
      _
    // Predicated region
    $region18: #{tpu_custom_call.1} parent=1 // pred_check
      _
    $region19: #{tpu_custom_call.1} parent=1 // pred_check_branch
      %41 = sbr.rel (0) target = $region21
    $region20: #{tpu_custom_call.1} parent=1 // pred_region
      %42 = dma.done [#allocation6], 2048
    $region21: #{tpu_custom_call.1} parent=1 // pred_fallthru
      _
    %v43 = vld [vmem:[#allocation2] sm:$0xff]
    %v44 = vld [vmem:[#allocation2 + $0x8] sm:$0xff]
    %v45 = vld [vmem:[#allocation2 + $0x10] sm:$0xff]
    %v46 = vld [vmem:[#allocation2 + $0x18] sm:$0xff]
    %v47 = vld [vmem:[#allocation2 + $0x20] sm:$0xff]
    %v48 = vld [vmem:[#allocation2 + $0x28] sm:$0xff]
    %v49 = vld [vmem:[#allocation2 + $0x30] sm:$0xff]
    %v50 = vld [vmem:[#allocation2 + $0x38] sm:$0xff]
    %v51 = vld [vmem:[#allocation2 + $0x40] sm:$0xff]
    %v52 = vld [vmem:[#allocation2 + $0x48] sm:$0xff]
    %v53 = vld [vmem:[#allocation2 + $0x50] sm:$0xff]
    %v54 = vld [vmem:[#allocation2 + $0x58] sm:$0xff]
    %v55 = vld [vmem:[#allocation2 + $0x60] sm:$0xff]
    %v56 = vld [vmem:[#allocation2 + $0x68] sm:$0xff]
    %v57 = vld [vmem:[#allocation2 + $0x70] sm:$0xff]
    %v58 = vld [vmem:[#allocation2 + $0x78] sm:$0xff]
    %v59 = vld [vmem:[#allocation5] sm:$0xff]
    %v60 = vld [vmem:[#allocation5 + $0x8] sm:$0xff]
    %v61 = vld [vmem:[#allocation5 + $0x10] sm:$0xff]
    %v62 = vld [vmem:[#allocation5 + $0x18] sm:$0xff]
    %v63 = vld [vmem:[#allocation5 + $0x20] sm:$0xff]
    %v64 = vld [vmem:[#allocation5 + $0x28] sm:$0xff]
    %v65 = vld [vmem:[#allocation5 + $0x30] sm:$0xff]
    %v66 = vld [vmem:[#allocation5 + $0x38] sm:$0xff]
    %v67 = vld [vmem:[#allocation5 + $0x40] sm:$0xff]
    %v68 = vld [vmem:[#allocation5 + $0x48] sm:$0xff]
    %v69 = vld [vmem:[#allocation5 + $0x50] sm:$0xff]
    %v70 = vld [vmem:[#allocation5 + $0x58] sm:$0xff]
    %v71 = vld [vmem:[#allocation5 + $0x60] sm:$0xff]
    %v72 = vld [vmem:[#allocation5 + $0x68] sm:$0xff]
    %v73 = vld [vmem:[#allocation5 + $0x70] sm:$0xff]
    %v74 = vld [vmem:[#allocation5 + $0x78] sm:$0xff]
    %v75 = vld [vmem:[%s2] sm:$0x1]
    %v77 = vlaneseq
    %v78 = vshrl.u32 %v77, 7
    %v79 = vsub.s32 0, %v78
    %v80 = vrot.slane %v75, %v79
    %82 = vmatprep.subr.mxu0 0.0
    %83 = vmatpush1.xpose.msra.mxu0 %v59
    %84 = vmatprep.subr.mxu0 0.0
    %85 = vmatpush1.xpose.msra.mxu0 %v60
    %86 = vmatprep.subr.mxu0 0.0
    %87 = vmatpush1.xpose.msra.mxu0 %v61
    %88 = vmatprep.subr.mxu0 0.0
    %89 = vmatpush1.xpose.msra.mxu0 %v62
    %90 = vmatprep.subr.mxu0 0.0
    %91 = vmatpush1.xpose.msra.mxu0 %v63
    %92 = vmatprep.subr.mxu0 0.0
    %93 = vmatpush1.xpose.msra.mxu0 %v64
    %94 = vmatprep.subr.mxu0 0.0
    %95 = vmatpush1.xpose.msra.mxu0 %v65
    %96 = vmatprep.subr.mxu0 0.0
    %97 = vmatpush1.xpose.msra.mxu0 %v66
    %98 = vmatprep.subr.mxu0 0.0
    %99 = vmatpush1.xpose.msra.mxu0 %v67
    %100 = vmatprep.subr.mxu0 0.0
    %101 = vmatpush1.xpose.msra.mxu0 %v68
    %102 = vmatprep.subr.mxu0 0.0
    %103 = vmatpush1.xpose.msra.mxu0 %v69
    %104 = vmatprep.subr.mxu0 0.0
    %105 = vmatpush1.xpose.msra.mxu0 %v70
    %106 = vmatprep.subr.mxu0 0.0
    %107 = vmatpush1.xpose.msra.mxu0 %v71
    %108 = vmatprep.subr.mxu0 0.0
    %109 = vmatpush1.xpose.msra.mxu0 %v72
    %110 = vmatprep.subr.mxu0 0.0
    %111 = vmatpush1.xpose.msra.mxu0 %v73
    %112 = vmatprep.subr.mxu0 0.0
    %113 = vmatpush1.xpose.msra.mxu0 %v74
    %114 = vmatprep.subr.mxu0 0.0
    %115 = vmatpush1.xpose.msra.mxu0 0.0
    %116 = vmatprep.subr.mxu0 0.0
    %117 = vmatpush1.xpose.msra.mxu0 0.0
    %118 = vmatprep.subr.mxu0 0.0
    %119 = vmatpush1.xpose.msra.mxu0 0.0
    %120 = vmatprep.subr.mxu0 0.0
    %121 = vmatpush1.xpose.msra.mxu0 0.0
    %122 = vmatprep.subr.mxu0 0.0
    %123 = vmatpush1.xpose.msra.mxu0 0.0
    %124 = vmatprep.subr.mxu0 0.0
    %125 = vmatpush1.xpose.msra.mxu0 0.0
    %126 = vmatprep.subr.mxu0 0.0
    %127 = vmatpush1.xpose.msra.mxu0 0.0
    %128 = vmatprep.subr.mxu0 0.0
    %129 = vmatpush1.xpose.msra.mxu0 0.0
    %130 = vmatprep.subr.mxu0 0.0
    %131 = vmatpush1.xpose.msra.mxu0 0.0
    %132 = vmatprep.subr.mxu0 0.0
    %133 = vmatpush1.xpose.msra.mxu0 0.0
    %134 = vmatprep.subr.mxu0 0.0
    %135 = vmatpush1.xpose.msra.mxu0 0.0
    %136 = vmatprep.subr.mxu0 0.0
    %137 = vmatpush1.xpose.msra.mxu0 0.0
    %138 = vmatprep.subr.mxu0 0.0
    %139 = vmatpush1.xpose.msra.mxu0 0.0
    %140 = vmatprep.subr.mxu0 0.0
    %141 = vmatpush1.xpose.msra.mxu0 0.0
    %142 = vmatprep.subr.mxu0 0.0
    %143 = vmatpush1.xpose.msra.mxu0 0.0
    %144 = vmatprep.subr.mxu0 0.0
    %145 = vmatpush1.xpose.msra.mxu0 0.0
    %146 = vmatprep.mubr.f32.mxu0 0.0
    %147 = vmatmul.mubr.f32.gmra.mrb[0].mxu0 %v43
    %v148 = vpop.f32.mrb[0].mxu0
    %v149 = vadd.f32 %v80, %v148
    %v150 = vpop.f32.mrb[0].mxu0
    %151 = vmatprep.mubr.f32.mxu0 0.0
    %152 = vmatmul.mubr.f32.gmra.mrb[0].mxu0 %v44
    %v153 = vpop.f32.mrb[0].mxu0
    %v154 = vadd.f32 %v80, %v153
    %v155 = vpop.f32.mrb[0].mxu0
    %156 = vmatprep.mubr.f32.mxu0 0.0
    %157 = vmatmul.mubr.f32.gmra.mrb[0].mxu0 %v45
    %v158 = vpop.f32.mrb[0].mxu0
    %v159 = vadd.f32 %v80, %v158
    %v160 = vpop.f32.mrb[0].mxu0
    %161 = vmatprep.mubr.f32.mxu0 0.0
    %162 = vmatmul.mubr.f32.gmra.mrb[0].mxu0 %v46
    %v163 = vpop.f32.mrb[0].mxu0
    %v164 = vadd.f32 %v80, %v163
    %v165 = vpop.f32.mrb[0].mxu0
    %166 = vmatprep.mubr.f32.mxu0 0.0
    %167 = vmatmul.mubr.f32.gmra.mrb[0].mxu0 %v47
    %v168 = vpop.f32.mrb[0].mxu0
    %v169 = vadd.f32 %v80, %v168
    %v170 = vpop.f32.mrb[0].mxu0
    %171 = vmatprep.mubr.f32.mxu0 0.0
    %172 = vmatmul.mubr.f32.gmra.mrb[0].mxu0 %v48
    %v173 = vpop.f32.mrb[0].mxu0
    %v174 = vadd.f32 %v80, %v173
    %v175 = vpop.f32.mrb[0].mxu0
    %176 = vmatprep.mubr.f32.mxu0 0.0
    %177 = vmatmul.mubr.f32.gmra.mrb[0].mxu0 %v49
    %v178 = vpop.f32.mrb[0].mxu0
    %v179 = vadd.f32 %v80, %v178
    %v180 = vpop.f32.mrb[0].mxu0
    %181 = vmatprep.mubr.f32.mxu0 0.0
    %182 = vmatmul.mubr.f32.gmra.mrb[0].mxu0 %v50
    %v183 = vpop.f32.mrb[0].mxu0
    %v184 = vadd.f32 %v80, %v183
    %v185 = vpop.f32.mrb[0].mxu0
    %186 = vmatprep.mubr.f32.mxu0 0.0
    %187 = vmatmul.mubr.f32.gmra.mrb[0].mxu0 %v51
    %v188 = vpop.f32.mrb[0].mxu0
    %v189 = vadd.f32 %v80, %v188
    %v190 = vpop.f32.mrb[0].mxu0
    %191 = vmatprep.mubr.f32.mxu0 0.0
    %192 = vmatmul.mubr.f32.gmra.mrb[0].mxu0 %v52
    %v193 = vpop.f32.mrb[0].mxu0
    %v194 = vadd.f32 %v80, %v193
    %v195 = vpop.f32.mrb[0].mxu0
    %196 = vmatprep.mubr.f32.mxu0 0.0
    %197 = vmatmul.mubr.f32.gmra.mrb[0].mxu0 %v53
    %v198 = vpop.f32.mrb[0].mxu0
    %v199 = vadd.f32 %v80, %v198
    %v200 = vpop.f32.mrb[0].mxu0
    %201 = vmatprep.mubr.f32.mxu0 0.0
    %202 = vmatmul.mubr.f32.gmra.mrb[0].mxu0 %v54
    %v203 = vpop.f32.mrb[0].mxu0
    %v204 = vadd.f32 %v80, %v203
    %v205 = vpop.f32.mrb[0].mxu0
    %206 = vmatprep.mubr.f32.mxu0 0.0
    %207 = vmatmul.mubr.f32.gmra.mrb[0].mxu0 %v55
    %v208 = vpop.f32.mrb[0].mxu0
    %v209 = vadd.f32 %v80, %v208
    %v210 = vpop.f32.mrb[0].mxu0
    %211 = vmatprep.mubr.f32.mxu0 0.0
    %212 = vmatmul.mubr.f32.gmra.mrb[0].mxu0 %v56
    %v213 = vpop.f32.mrb[0].mxu0
    %v214 = vadd.f32 %v80, %v213
    %v215 = vpop.f32.mrb[0].mxu0
    %216 = vmatprep.mubr.f32.mxu0 0.0
    %217 = vmatmul.mubr.f32.gmra.mrb[0].mxu0 %v57
    %v218 = vpop.f32.mrb[0].mxu0
    %v219 = vadd.f32 %v80, %v218
    %v220 = vpop.f32.mrb[0].mxu0
    %221 = vmatprep.mubr.f32.mxu0 0.0
    %222 = vmatmul.mubr.f32.gmra.mrb[0].mxu0 %v58
    %v223 = vpop.f32.mrb[0].mxu0
    %v224 = vadd.f32 %v80, %v223
    %v225 = vpop.f32.mrb[0].mxu0
    %226 = vdwg.mxu0
    %227 = vst [vmem:[#allocation7] sm:$0xff] %v149
    %228 = vst [vmem:[#allocation7 + $0x8] sm:$0xff] %v154
    %229 = vst [vmem:[#allocation7 + $0x10] sm:$0xff] %v159
    %230 = vst [vmem:[#allocation7 + $0x18] sm:$0xff] %v164
    %231 = vst [vmem:[#allocation7 + $0x20] sm:$0xff] %v169
    %232 = vst [vmem:[#allocation7 + $0x28] sm:$0xff] %v174
    %233 = vst [vmem:[#allocation7 + $0x30] sm:$0xff] %v179
    %234 = vst [vmem:[#allocation7 + $0x38] sm:$0xff] %v184
    %235 = vst [vmem:[#allocation7 + $0x40] sm:$0xff] %v189
    %236 = vst [vmem:[#allocation7 + $0x48] sm:$0xff] %v194
    %237 = vst [vmem:[#allocation7 + $0x50] sm:$0xff] %v199
    %238 = vst [vmem:[#allocation7 + $0x58] sm:$0xff] %v204
    %239 = vst [vmem:[#allocation7 + $0x60] sm:$0xff] %v209
    %240 = vst [vmem:[#allocation7 + $0x68] sm:$0xff] %v214
    %241 = vst [vmem:[#allocation7 + $0x70] sm:$0xff] %v219
    %242 = vst [vmem:[#allocation7 + $0x78] sm:$0xff] %v224
    // Predicated region
    $region22: #{tpu_custom_call.1} parent=1 // pred_check
      _
    $region23: #{tpu_custom_call.1} parent=1 // pred_check_branch
      %244 = sbr.rel (0) target = $region25
    $region24: #{tpu_custom_call.1} parent=1 // pred_region
      %s246 = ssub.s32 2048, 2048
      %247 = vsyncadd [#allocation4], %s246
      %s248 = sshll.u32 [#allocation7], 4
      %s249 = int_to_ptr.vmem [resolvable:$true] %s248
      %254 = dma.vmem_to_hbm [thread:$0]  %s249, 2048, %s3, [#allocation4], 128, 128, 8
    $region25: #{tpu_custom_call.1} parent=1 // pred_fallthru
      _
    // Predicated region
    $region26: #{tpu_custom_call.1} parent=1 // pred_check
      _
    $region27: #{tpu_custom_call.1} parent=1 // pred_check_branch
      %256 = sbr.rel (0) target = $region29
    $region28: #{tpu_custom_call.1} parent=1 // pred_region
      %257 = dma.done [#allocation4], 2048
    $region29: #{tpu_custom_call.1} parent=1 // pred_fallthru
      _
    %258 = vsyncpa [#allocation3], 1
    %259 = vsyncpa [#allocation6], 1
    %260 = vsyncpa [#allocation4], 1

</llo_original>
